<compile_context>
chip_gen: v6e
topology: v6e:2x2x1
jax: 0.10.0
libtpu: 0.0.40
codegen_flags: <defaults>
</compile_context>

<pallas_src>
import jax
import jax.numpy as jnp
from jax.experimental import pallas as pl
from jax.experimental.pallas import tpu as pltpu

ACTION_DIM = 8     # [:3] translation, [3:7] quaternion, [7:] gripper
HIDDEN = 128
OUT_PAD = 128      # lane-dense padded output width
_QNORM_EPS = 1e-12


def _round_up(x, m):
    return ((x + m - 1) // m) * m


def _actor_kernel(obs_ref, st_ref, w1o_ref, w1s_ref, w2_ref, w3_ref,
                  consts_ref, out_ref):
    """Fused actor forward: split-input MLP -> tanh -> rescale -> quat-norm."""
    consts = consts_ref[...]            # (8, 128) f32, single packed operand
    b1 = consts[0:1, :]                 # layer-1 bias        (HIDDEN lanes)
    b2 = consts[1:2, :]                 # layer-2 bias        (HIDDEN lanes)
    b3 = consts[2:3, :]                 # layer-3 bias        (padded to 128)
    scale = consts[3:4, :]              # 0.5*(amax-amin)     (padded to 128)
    mid = consts[4:5, :]                # 0.5*(amax+amin)     (padded to 128)
    qmask = consts[5:6, :]              # 1.0 on quaternion lanes 3..6

    # layer 1: split K-dim matmul (obs part + state part), f32 accumulation
    h = (jnp.dot(obs_ref[...], w1o_ref[...], preferred_element_type=jnp.float32)
         + jnp.dot(st_ref[...], w1s_ref[...], preferred_element_type=jnp.float32)
         + b1)
    h = jnp.maximum(h, 0.0)

    # layer 2
    h = jnp.dot(h.astype(jnp.bfloat16), w2_ref[...],
                preferred_element_type=jnp.float32) + b2
    h = jnp.maximum(h, 0.0)

    # layer 3 (lane-dense: N padded to 128)
    pi = jnp.dot(h.astype(jnp.bfloat16), w3_ref[...],
                 preferred_element_type=jnp.float32) + b3

    # tanh squash + folded rescale: 0.5*(x+1)*(amax-amin)+amin == x*scale+mid
    # (padded lanes have scale = mid = 0 so they stay 0)
    pi = jnp.tanh(pi) * scale + mid

    # cat([pi[:, :3], normalize(pi[:, 3:7]), pi[:, 7:]]) via the lane mask.
    sq = pi * pi * qmask
    inv = jax.lax.rsqrt(jnp.sum(sq, axis=1, keepdims=True) + _QNORM_EPS)  # EUP
    out_ref[...] = jnp.where(qmask > 0.5, pi * inv, pi)


def prepare_actor_params(params, action_min_max):
    """One-time parameter prep (hoisted out of the per-call hot path).

    Returns (w1_obs_bf16, w1_state_bf16, w2_bf16, w3_padded_bf16, consts)
    where `consts` is an (8, 128) f32 array packing b1, b2, b3, scale, mid
    and the quaternion lane mask (rows 0..5)."""
    w1o, w1s, b1, w2, b2, w3, b3 = params
    w1o = w1o.astype(jnp.bfloat16)
    w1s = w1s.astype(jnp.bfloat16)
    w2 = w2.astype(jnp.bfloat16)
    w3p = jnp.zeros((HIDDEN, OUT_PAD), jnp.bfloat16).at[:, :ACTION_DIM].set(
        w3.astype(jnp.bfloat16))

    amin, amax = action_min_max[0], action_min_max[1]
    consts = jnp.zeros((8, OUT_PAD), jnp.float32)
    consts = consts.at[0, :HIDDEN].set(b1.reshape(HIDDEN))
    consts = consts.at[1, :HIDDEN].set(b2.reshape(HIDDEN))
    consts = consts.at[2, :ACTION_DIM].set(b3.reshape(ACTION_DIM))
    consts = consts.at[3, :ACTION_DIM].set(0.5 * (amax - amin))
    consts = consts.at[4, :ACTION_DIM].set(0.5 * (amax + amin))
    consts = consts.at[5, 3:7].set(1.0)              # quaternion lane mask
    return (w1o, w1s, w2, w3p, consts)


def actor_forward(observations, robot_state, prepared, *, block_b=None):
    """observations: (B, C, H, W) NCHW float32; robot_state: (B, S) float32.

    `prepared` is the output of prepare_actor_params (already cast/padded)."""
    w1o, w1s, w2, w3p, consts = prepared
    B = observations.shape[0]
    obs = observations.reshape(B, -1).astype(jnp.bfloat16)
    st = robot_state.astype(jnp.bfloat16)
    d_obs, d_st = obs.shape[1], st.shape[1]

    # Batch tiling: single big block for B <= 256 (amortizes per-step grid
    # overhead, fills MXU rows); 256-row blocks otherwise, which also gives
    # >= 2 grid steps so the "parallel" axis engages both v7x TensorCores.
    if block_b is None:
        block_b = _round_up(B, 16) if B <= 256 else 256
    block_b = max(16, _round_up(block_b, 16))       # bf16 sublane packing
    n_blk = pl.cdiv(B, block_b)
    Bp = n_blk * block_b
    if Bp != B:
        obs = jnp.pad(obs, ((0, Bp - B), (0, 0)))
        st = jnp.pad(st, ((0, Bp - B), (0, 0)))

    # Weights stay VMEM-resident via constant index_maps.  (Their second
    # pipeline buffer is dead weight, but at these sizes it is a few hundred
    # KiB; revisit single-buffering only if d_obs grows to image scale.)
    const = lambda i: (0, 0)
    out = pl.pallas_call(
        _actor_kernel,
        out_shape=jax.ShapeDtypeStruct((Bp, OUT_PAD), jnp.float32),
        grid_spec=pltpu.PrefetchScalarGridSpec(
            num_scalar_prefetch=0,
            grid=(n_blk,),
            in_specs=[
                pl.BlockSpec((block_b, d_obs), lambda i: (i, 0)),   # obs tile
                pl.BlockSpec((block_b, d_st), lambda i: (i, 0)),    # state tile
                pl.BlockSpec((d_obs, HIDDEN), const),               # w1_obs
                pl.BlockSpec((d_st, HIDDEN), const),                # w1_state
                pl.BlockSpec((HIDDEN, HIDDEN), const),              # w2
                pl.BlockSpec((HIDDEN, OUT_PAD), const),             # w3 (padded)
                pl.BlockSpec((8, OUT_PAD), const),                  # packed consts
            ],
            out_specs=pl.BlockSpec((block_b, OUT_PAD), lambda i: (i, 0)),
        ),
        compiler_params=pltpu.CompilerParams(
            dimension_semantics=("parallel",)),
    )(obs, st, w1o, w1s, w2, w3p, consts)

    # slice back to the real batch and the 8 real action columns
    return out[:B, :ACTION_DIM]


def make_params(key, d_obs, d_state):
    """Deterministic parameter init (stand-in for actor_network.build())."""
    ks = jax.random.split(key, 7)
    d_in = d_obs + d_state
    s1 = 1.0 / jnp.sqrt(d_in)
    s2 = 1.0 / jnp.sqrt(HIDDEN)
    w1o = jax.random.normal(ks[0], (d_obs, HIDDEN), jnp.float32) * s1
    w1s = jax.random.normal(ks[1], (d_state, HIDDEN), jnp.float32) * s1
    b1 = jax.random.normal(ks[2], (1, HIDDEN), jnp.float32) * 0.01
    w2 = jax.random.normal(ks[3], (HIDDEN, HIDDEN), jnp.float32) * s2
    b2 = jax.random.normal(ks[4], (1, HIDDEN), jnp.float32) * 0.01
    w3 = jax.random.normal(ks[5], (HIDDEN, ACTION_DIM), jnp.float32) * s2
    b3 = jax.random.normal(ks[6], (1, ACTION_DIM), jnp.float32) * 0.01
    return (w1o, w1s, b1, w2, b2, w3, b3)


if __name__ == "__main__":
    key = jax.random.PRNGKey(0)
    k_obs, k_state, k_params = jax.random.split(key, 3)

    B, C, H, W = 2, 4, 8, 8         # small NCHW observation
    S = 32                          # robot proprioceptive state dim
    d_obs = C * H * W

    observations = jax.random.normal(k_obs, (B, C, H, W), jnp.float32)
    robot_state = jax.random.normal(k_state, (B, S), jnp.float32)
    params = make_params(k_params, d_obs, S)

    # action_min_max: row 0 = min, row 1 = max (shape (2, ACTION_DIM))
    action_min_max = jnp.stack([
        jnp.array([-0.3, -0.3, -0.3, -1.0, -1.0, -1.0, -1.0, 0.0], jnp.float32),
        jnp.array([0.3, 0.3, 0.3, 1.0, 1.0, 1.0, 1.0, 1.0], jnp.float32),
    ], axis=0)

    # one-time prep (hoisted out of the hot path), then the fused forward
    prepared = prepare_actor_params(params, action_min_max)
    fwd = jax.jit(actor_forward)
    pi = fwd(observations, robot_state, prepared)
    pi = jax.block_until_ready(pi)

    # sanity: quaternion part must be unit-norm
    qn = jnp.linalg.norm(pi[:, 3:7], axis=-1)
    assert pi.shape == (B, ACTION_DIM)
    assert bool(jnp.all(jnp.abs(qn - 1.0) < 1e-4))
    assert bool(jnp.all(jnp.isfinite(pi)))

    print("KERNEL_OK")
</pallas_src>

<mosaic_0001>
module attributes {stable_mosaic.version = 11 : i64} {
  func.func @_actor_kernel(%arg0: i32, %arg1: memref<16x256xbf16, #tpu.memory_space<vmem>>, %arg2: memref<16x32xbf16, #tpu.memory_space<vmem>>, %arg3: memref<256x128xbf16, #tpu.memory_space<vmem>>, %arg4: memref<32x128xbf16, #tpu.memory_space<vmem>>, %arg5: memref<128x128xbf16, #tpu.memory_space<vmem>>, %arg6: memref<128x128xbf16, #tpu.memory_space<vmem>>, %arg7: memref<8x128xf32, #tpu.memory_space<vmem>>, %arg8: memref<16x128xf32, #tpu.memory_space<vmem>>) attributes {dimension_semantics = [#tpu.dimension_semantics<parallel>], iteration_bounds = array<i64: 1>, scalar_prefetch = 0 : i64, scratch_operands = 0 : i64, tpu.core_type = #tpu.core_type<tc>, window_params = [{transform_indices = @transform_0, window_bounds = array<i64: 16, 256>}, {transform_indices = @transform_1, window_bounds = array<i64: 16, 32>}, {pipeline_mode = #tpu.pipeline_mode<synchronous>, transform_indices = @transform_2, window_bounds = array<i64: 256, 128>}, {pipeline_mode = #tpu.pipeline_mode<synchronous>, transform_indices = @transform_3, window_bounds = array<i64: 32, 128>}, {pipeline_mode = #tpu.pipeline_mode<synchronous>, transform_indices = @transform_4, window_bounds = array<i64: 128, 128>}, {pipeline_mode = #tpu.pipeline_mode<synchronous>, transform_indices = @transform_5, window_bounds = array<i64: 128, 128>}, {pipeline_mode = #tpu.pipeline_mode<synchronous>, transform_indices = @transform_6, window_bounds = array<i64: 8, 128>}, {transform_indices = @transform_7, window_bounds = array<i64: 16, 128>}]} {
    %c0 = arith.constant 0 : index
    %c0_0 = arith.constant 0 : index
    %0 = vector.load %arg7[%c0, %c0_0] : memref<8x128xf32, #tpu.memory_space<vmem>>, vector<8x128xf32>
    %1 = vector.extract_strided_slice %0 {offsets = [0, 0], sizes = [1, 128], strides = [1, 1]} : vector<8x128xf32> to vector<1x128xf32>
    %2 = vector.extract_strided_slice %0 {offsets = [1, 0], sizes = [1, 128], strides = [1, 1]} : vector<8x128xf32> to vector<1x128xf32>
    %3 = vector.extract_strided_slice %0 {offsets = [2, 0], sizes = [1, 128], strides = [1, 1]} : vector<8x128xf32> to vector<1x128xf32>
    %4 = vector.extract_strided_slice %0 {offsets = [3, 0], sizes = [1, 128], strides = [1, 1]} : vector<8x128xf32> to vector<1x128xf32>
    %5 = vector.extract_strided_slice %0 {offsets = [4, 0], sizes = [1, 128], strides = [1, 1]} : vector<8x128xf32> to vector<1x128xf32>
    %6 = vector.extract_strided_slice %0 {offsets = [5, 0], sizes = [1, 128], strides = [1, 1]} : vector<8x128xf32> to vector<1x128xf32>
    %c0_1 = arith.constant 0 : index
    %c0_2 = arith.constant 0 : index
    %7 = vector.load %arg1[%c0_1, %c0_2] : memref<16x256xbf16, #tpu.memory_space<vmem>>, vector<16x256xbf16>
    %c0_3 = arith.constant 0 : index
    %c0_4 = arith.constant 0 : index
    %8 = vector.load %arg3[%c0_3, %c0_4] : memref<256x128xbf16, #tpu.memory_space<vmem>>, vector<256x128xbf16>
    %cst = arith.constant dense<0.000000e+00> : vector<16x128xf32>
    %9 = tpu.matmul %7, %8, %cst {dimension_numbers = #tpu.dot_dimension_numbers<[1], [0], [0], [1], [0, 0, 1, 1], [], []>} : vector<16x256xbf16>, vector<256x128xbf16>, vector<16x128xf32> -> vector<16x128xf32>
    %c0_5 = arith.constant 0 : index
    %c0_6 = arith.constant 0 : index
    %10 = vector.load %arg2[%c0_5, %c0_6] : memref<16x32xbf16, #tpu.memory_space<vmem>>, vector<16x32xbf16>
    %c0_7 = arith.constant 0 : index
    %c0_8 = arith.constant 0 : index
    %11 = vector.load %arg4[%c0_7, %c0_8] : memref<32x128xbf16, #tpu.memory_space<vmem>>, vector<32x128xbf16>
    %cst_9 = arith.constant dense<0.000000e+00> : vector<16x128xf32>
    %12 = tpu.matmul %10, %11, %cst_9 {dimension_numbers = #tpu.dot_dimension_numbers<[1], [0], [0], [1], [0, 0, 1, 1], [], []>} : vector<16x32xbf16>, vector<32x128xbf16>, vector<16x128xf32> -> vector<16x128xf32>
    %13 = arith.addf %9, %12 : vector<16x128xf32>
    %14 = vector.broadcast %1 : vector<1x128xf32> to vector<16x128xf32>
    %15 = arith.addf %13, %14 : vector<16x128xf32>
    %cst_10 = arith.constant 0.000000e+00 : f32
    %16 = vector.broadcast %cst_10 : f32 to vector<16x128xf32>
    %17 = arith.maximumf %15, %16 : vector<16x128xf32>
    %18 = arith.truncf %17 : vector<16x128xf32> to vector<16x128xbf16>
    %c0_11 = arith.constant 0 : index
    %c0_12 = arith.constant 0 : index
    %19 = vector.load %arg5[%c0_11, %c0_12] : memref<128x128xbf16, #tpu.memory_space<vmem>>, vector<128x128xbf16>
    %cst_13 = arith.constant dense<0.000000e+00> : vector<16x128xf32>
    %20 = tpu.matmul %18, %19, %cst_13 {dimension_numbers = #tpu.dot_dimension_numbers<[1], [0], [0], [1], [0, 0, 1, 1], [], []>} : vector<16x128xbf16>, vector<128x128xbf16>, vector<16x128xf32> -> vector<16x128xf32>
    %21 = vector.broadcast %2 : vector<1x128xf32> to vector<16x128xf32>
    %22 = arith.addf %20, %21 : vector<16x128xf32>
    %cst_14 = arith.constant 0.000000e+00 : f32
    %23 = vector.broadcast %cst_14 : f32 to vector<16x128xf32>
    %24 = arith.maximumf %22, %23 : vector<16x128xf32>
    %25 = arith.truncf %24 : vector<16x128xf32> to vector<16x128xbf16>
    %c0_15 = arith.constant 0 : index
    %c0_16 = arith.constant 0 : index
    %26 = vector.load %arg6[%c0_15, %c0_16] : memref<128x128xbf16, #tpu.memory_space<vmem>>, vector<128x128xbf16>
    %cst_17 = arith.constant dense<0.000000e+00> : vector<16x128xf32>
    %27 = tpu.matmul %25, %26, %cst_17 {dimension_numbers = #tpu.dot_dimension_numbers<[1], [0], [0], [1], [0, 0, 1, 1], [], []>} : vector<16x128xbf16>, vector<128x128xbf16>, vector<16x128xf32> -> vector<16x128xf32>
    %28 = vector.broadcast %3 : vector<1x128xf32> to vector<16x128xf32>
    %29 = arith.addf %27, %28 : vector<16x128xf32>
    %30 = math.tanh %29 : vector<16x128xf32>
    %31 = vector.broadcast %4 : vector<1x128xf32> to vector<16x128xf32>
    %32 = arith.mulf %30, %31 : vector<16x128xf32>
    %33 = vector.broadcast %5 : vector<1x128xf32> to vector<16x128xf32>
    %34 = arith.addf %32, %33 : vector<16x128xf32>
    %35 = arith.mulf %34, %34 : vector<16x128xf32>
    %36 = vector.broadcast %6 : vector<1x128xf32> to vector<16x128xf32>
    %37 = arith.mulf %35, %36 : vector<16x128xf32>
    %cst_18 = arith.constant dense<0.000000e+00> : vector<16xf32>
    %38 = vector.multi_reduction <add>, %37, %cst_18 [1] : vector<16x128xf32> to vector<16xf32>
    %39 = vector.shape_cast %38 : vector<16xf32> to vector<16x1xf32>
    %cst_19 = arith.constant 9.99999996E-13 : f32
    %40 = vector.broadcast %cst_19 : f32 to vector<16x1xf32>
    %41 = arith.addf %39, %40 : vector<16x1xf32>
    %42 = math.rsqrt %41 : vector<16x1xf32>
    %cst_20 = arith.constant 5.000000e-01 : f32
    %43 = vector.broadcast %cst_20 : f32 to vector<1x128xf32>
    %44 = arith.cmpf ogt, %6, %43 : vector<1x128xf32>
    %45 = vector.broadcast %42 : vector<16x1xf32> to vector<16x128xf32>
    %46 = arith.mulf %34, %45 : vector<16x128xf32>
    %47 = vector.shape_cast %44 : vector<1x128xi1> to vector<1x128xi1>
    %48 = vector.broadcast %47 : vector<1x128xi1> to vector<16x128xi1>
    %49 = arith.select %48, %46, %34 : vector<16x128xi1>, vector<16x128xf32>
    %c0_21 = arith.constant 0 : index
    %c0_22 = arith.constant 0 : index
    %50 = vector.load %arg8[%c0_21, %c0_22] : memref<16x128xf32, #tpu.memory_space<vmem>>, vector<16x128xf32>
    tpu.vector_store %arg8[%c0_21, %c0_22], %49 {strides = array<i32>} : memref<16x128xf32, #tpu.memory_space<vmem>>, vector<16x128xf32>,
    return
  }
  func.func @transform_0(%arg0: i32) -> (i32, i32) {
    %c0_i32 = arith.constant 0 : i32
    %c0_i32_0 = arith.constant 0 : i32
    return %arg0, %c0_i32 : i32, i32
  }
  func.func @transform_1(%arg0: i32) -> (i32, i32) {
    %c0_i32 = arith.constant 0 : i32
    %c0_i32_0 = arith.constant 0 : i32
    return %arg0, %c0_i32 : i32, i32
  }
  func.func @transform_2(%arg0: i32) -> (i32, i32) {
    %c0_i32 = arith.constant 0 : i32
    %c0_i32_0 = arith.constant 0 : i32
    %c0_i32_1 = arith.constant 0 : i32
    return %c0_i32, %c0_i32_0 : i32, i32
  }
  func.func @transform_3(%arg0: i32) -> (i32, i32) {
    %c0_i32 = arith.constant 0 : i32
    %c0_i32_0 = arith.constant 0 : i32
    %c0_i32_1 = arith.constant 0 : i32
    return %c0_i32, %c0_i32_0 : i32, i32
  }
  func.func @transform_4(%arg0: i32) -> (i32, i32) {
    %c0_i32 = arith.constant 0 : i32
    %c0_i32_0 = arith.constant 0 : i32
    %c0_i32_1 = arith.constant 0 : i32
    return %c0_i32, %c0_i32_0 : i32, i32
  }
  func.func @transform_5(%arg0: i32) -> (i32, i32) {
    %c0_i32 = arith.constant 0 : i32
    %c0_i32_0 = arith.constant 0 : i32
    %c0_i32_1 = arith.constant 0 : i32
    return %c0_i32, %c0_i32_0 : i32, i32
  }
  func.func @transform_6(%arg0: i32) -> (i32, i32) {
    %c0_i32 = arith.constant 0 : i32
    %c0_i32_0 = arith.constant 0 : i32
    %c0_i32_1 = arith.constant 0 : i32
    return %c0_i32, %c0_i32_0 : i32, i32
  }
  func.func @transform_7(%arg0: i32) -> (i32, i32) {
    %c0_i32 = arith.constant 0 : i32
    %c0_i32_0 = arith.constant 0 : i32
    return %arg0, %c0_i32 : i32, i32
  }
}

</mosaic_0001>

<llo_original>
// kernel: actor_forward.1
$region0: #{actor_forward.1}
  #allocation0 [shape = 'u32[]', space=smem, size = 0x4, offset = 0x4, fixed_abs, tag = 'smem constant byte address 0x4 - core index']
  #allocation1 [shape = 'u32[144,128]{1,0:T(1,128)}', space=vmem, size = 0x12000, scoped, tag = 'internal scratch']
  %s0 = inlined_call_operand.vmem [shape: bf16[16,256], index: 0, kind: input, shape index: {}]
  %s1 = inlined_call_operand.vmem [shape: bf16[16,32], index: 1, kind: input, shape index: {}]
  %s2 = inlined_call_operand.vmem [shape: bf16[256,128], index: 2, kind: input, shape index: {}]
  %s3 = inlined_call_operand.vmem [shape: bf16[32,128], index: 3, kind: input, shape index: {}]
  %s4 = inlined_call_operand.hbm [shape: bf16[128,128], index: 4, kind: input, shape index: {}]
  %s5 = inlined_call_operand.hbm [shape: bf16[128,128], index: 5, kind: input, shape index: {}]
  %s6 = inlined_call_operand.vmem [shape: f32[8,128], index: 6, kind: input, shape index: {}]
  %s7 = inlined_call_operand.vmem [shape: f32[16,128], index: 7, kind: output, shape index: {}]
  %s8 = sld [smem:[#allocation0]]
  $region46: #{actor_forward.1} parent=0
    _
  %s10 = ssub.s32 1, %s8
  %s11 = scalar_select 0, %s10, %s8
  $region1: #{actor_forward.1} parent=0
    #allocation2 [shape = 'u8[32768]{0}', space=vmem, size = 0x8000, scoped, tag = 'input window, operand 4, single buffered']
    #allocation3 [shape = 's32[1]{0}', space=sflag, size = 0x4, scoped, tag = 'scoped memory for actor_forward.1']
    #allocation4 [shape = 'u8[32768]{0}', space=vmem, size = 0x8000, scoped, tag = 'input window, operand 5, single buffered']
    #allocation5 [shape = 's32[1]{0}', space=sflag, size = 0x4, scoped, tag = 'scoped memory for actor_forward.1']
    %12 = vsyncpa [#allocation3], 0
    %13 = vsyncpa [#allocation5], 0
    // Predicated region
    $region2: #{actor_forward.1} parent=1 // pred_check
      _
    $region3: #{actor_forward.1} parent=1 // pred_check_branch
      %15 = sbr.rel (0) target = $region5
    $region4: #{actor_forward.1} parent=1 // pred_region
      _
    $region5: #{actor_forward.1} parent=1 // pred_fallthru
      _
    // Predicated region
    $region6: #{actor_forward.1} parent=1 // pred_check
      _
    $region7: #{actor_forward.1} parent=1 // pred_check_branch
      %17 = sbr.rel (0) target = $region9
    $region8: #{actor_forward.1} parent=1 // pred_region
      _
    $region9: #{actor_forward.1} parent=1 // pred_fallthru
      _
    // Predicated region
    $region10: #{actor_forward.1} parent=1 // pred_check
      _
    $region11: #{actor_forward.1} parent=1 // pred_check_branch
      %19 = sbr.rel (0) target = $region13
    $region12: #{actor_forward.1} parent=1 // pred_region
      _
    $region13: #{actor_forward.1} parent=1 // pred_fallthru
      _
    // Predicated region
    $region14: #{actor_forward.1} parent=1 // pred_check
      _
    $region15: #{actor_forward.1} parent=1 // pred_check_branch
      %21 = sbr.rel (0) target = $region17
    $region16: #{actor_forward.1} parent=1 // pred_region
      _
    $region17: #{actor_forward.1} parent=1 // pred_fallthru
      _
    // Predicated region
    $region18: #{actor_forward.1} parent=1 // pred_check
      _
    $region19: #{actor_forward.1} parent=1 // pred_check_branch
      %23 = sbr.rel (0) target = $region21
    $region20: #{actor_forward.1} parent=1 // pred_region
      %s25 = ssub.s32 1024, 1024
      %26 = vsyncadd [#allocation3], %s25
      %s27 = sshll.u32 [#allocation2], 4
      %s28 = int_to_ptr.vmem [resolvable:$true] %s27
      %33 = dma.hbm_to_vmem [thread:$0]  %s4, 1024, %s28, [#allocation3], 64, 64, 4
    $region21: #{actor_forward.1} parent=1 // pred_fallthru
      _
    // Predicated region
    $region22: #{actor_forward.1} parent=1 // pred_check
      _
    $region23: #{actor_forward.1} parent=1 // pred_check_branch
      %35 = sbr.rel (0) target = $region25
    $region24: #{actor_forward.1} parent=1 // pred_region
      %s37 = ssub.s32 1024, 1024
      %38 = vsyncadd [#allocation5], %s37
      %s39 = sshll.u32 [#allocation4], 4
      %s40 = int_to_ptr.vmem [resolvable:$true] %s39
      %45 = dma.hbm_to_vmem [thread:$0]  %s5, 1024, %s40, [#allocation5], 64, 64, 4
    $region25: #{actor_forward.1} parent=1 // pred_fallthru
      _
    // Predicated region
    $region26: #{actor_forward.1} parent=1 // pred_check
      _
    $region27: #{actor_forward.1} parent=1 // pred_check_branch
      %47 = sbr.rel (0) target = $region29
    $region28: #{actor_forward.1} parent=1 // pred_region
      _
    $region29: #{actor_forward.1} parent=1 // pred_fallthru
      _
    // Predicated region
    $region30: #{actor_forward.1} parent=1 // pred_check
      _
    $region31: #{actor_forward.1} parent=1 // pred_check_branch
      %49 = sbr.rel (0) target = $region33
    $region32: #{actor_forward.1} parent=1 // pred_region
      %50 = dma.done [#allocation3], 1024
    $region33: #{actor_forward.1} parent=1 // pred_fallthru
      _
    // Predicated region
    $region34: #{actor_forward.1} parent=1 // pred_check
      _
    $region35: #{actor_forward.1} parent=1 // pred_check_branch
      %52 = sbr.rel (0) target = $region37
    $region36: #{actor_forward.1} parent=1 // pred_region
      %53 = dma.done [#allocation5], 1024
    $region37: #{actor_forward.1} parent=1 // pred_fallthru
      _
    %v55 = vld [vmem:[%s6] sm:$0xff]
    %v56 = vld [vmem:[%s0] sm:$0xff]
    %v57 = vld [vmem:[%s0 + $0x8] sm:$0xff]
    %v58 = vld [vmem:[%s2] sm:$0xf]
    %v59 = vld [vmem:[%s2 + $0x4] sm:$0xf]
    %v60 = vld [vmem:[%s2 + $0x8] sm:$0xf]
    %v61 = vld [vmem:[%s2 + $0xc] sm:$0xf]
    %v62 = vld [vmem:[%s2 + $0x10] sm:$0xf]
    %v63 = vld [vmem:[%s2 + $0x14] sm:$0xf]
    %v64 = vld [vmem:[%s2 + $0x18] sm:$0xf]
    %v65 = vld [vmem:[%s2 + $0x1c] sm:$0xf]
    %v66 = vld [vmem:[%s2 + $0x20] sm:$0xf]
    %v67 = vld [vmem:[%s2 + $0x24] sm:$0xf]
    %v68 = vld [vmem:[%s2 + $0x28] sm:$0xf]
    %v69 = vld [vmem:[%s2 + $0x2c] sm:$0xf]
    %v70 = vld [vmem:[%s2 + $0x30] sm:$0xf]
    %v71 = vld [vmem:[%s2 + $0x34] sm:$0xf]
    %v72 = vld [vmem:[%s2 + $0x38] sm:$0xf]
    %v73 = vld [vmem:[%s2 + $0x3c] sm:$0xf]
    %v74 = vld [vmem:[%s2 + $0x40] sm:$0xf]
    %v75 = vld [vmem:[%s2 + $0x44] sm:$0xf]
    %v76 = vld [vmem:[%s2 + $0x48] sm:$0xf]
    %v77 = vld [vmem:[%s2 + $0x4c] sm:$0xf]
    %v78 = vld [vmem:[%s2 + $0x50] sm:$0xf]
    %v79 = vld [vmem:[%s2 + $0x54] sm:$0xf]
    %v80 = vld [vmem:[%s2 + $0x58] sm:$0xf]
    %v81 = vld [vmem:[%s2 + $0x5c] sm:$0xf]
    %v82 = vld [vmem:[%s2 + $0x60] sm:$0xf]
    %v83 = vld [vmem:[%s2 + $0x64] sm:$0xf]
    %v84 = vld [vmem:[%s2 + $0x68] sm:$0xf]
    %v85 = vld [vmem:[%s2 + $0x6c] sm:$0xf]
    %v86 = vld [vmem:[%s2 + $0x70] sm:$0xf]
    %v87 = vld [vmem:[%s2 + $0x74] sm:$0xf]
    %v88 = vld [vmem:[%s2 + $0x78] sm:$0xf]
    %v89 = vld [vmem:[%s2 + $0x7c] sm:$0xf]
    %v90 = vld [vmem:[%s1] sm:$0xf]
    %v91 = vld [vmem:[%s1 + $0x4] sm:$0xf]
    %v92 = vld [vmem:[%s3] sm:$0xf]
    %v93 = vld [vmem:[%s3 + $0x4] sm:$0xf]
    %v94 = vld [vmem:[%s3 + $0x8] sm:$0xf]
    %v95 = vld [vmem:[%s3 + $0xc] sm:$0xf]
    %v98 = vunpack.c.l.b16 %v90
    %v99 = vunpack.c.l.b16 %v91
    %v100 = vpack.c.b16 %v99, %v98
    %v105 = vunpack.c.l.b16 %v92
    %v106 = vunpack.c.l.b16 %v93
    %v107 = vunpack.c.l.b16 %v94
    %v108 = vunpack.c.l.b16 %v95
    %v109 = vpack.c.b16 %v106, %v105
    %v110 = vpack.c.b16 %v108, %v107
    %vm113 = vcmask 261120
    %v115 = vsel %vm113, %v100, 0
    %117 = vmatprep.subr.bf16.mxu0 0
    %118 = vmatpush1.bf16.msra.mxu0 0
    %119 = vmatprep.subr.bf16.mxu0 0
    %120 = vmatpush1.bf16.msra.mxu0 0
    %121 = vmatprep.subr.bf16.mxu0 0
    %122 = vmatpush1.bf16.msra.mxu0 0
    %123 = vmatprep.subr.bf16.mxu0 0
    %124 = vmatpush1.bf16.msra.mxu0 0
    %125 = vmatprep.subr.bf16.mxu0 0
    %126 = vmatpush1.bf16.msra.mxu0 0
    %127 = vmatprep.subr.bf16.mxu0 0
    %128 = vmatpush1.bf16.msra.mxu0 0
    %129 = vmatprep.subr.bf16.mxu0 0
    %130 = vmatpush1.bf16.msra.mxu0 %v110
    %131 = vmatprep.subr.bf16.mxu0 0
    %132 = vmatpush1.bf16.msra.mxu0 %v109
    %133 = vmatprep.subr.bf16.mxu0 0
    %134 = vmatpush2.bf16.msra.mxu0 0
    %135 = vmatprep.subr.bf16.mxu0 0
    %136 = vmatpush2.bf16.msra.mxu0 0
    %137 = vmatprep.subr.bf16.mxu0 0
    %138 = vmatpush2.bf16.msra.mxu0 0
    %139 = vmatprep.subr.bf16.mxu0 0
    %140 = vmatpush2.bf16.msra.mxu0 0
    %141 = vmatprep.subr.bf16.mxu0 0
    %142 = vmatpush2.bf16.msra.mxu0 0
    %143 = vmatprep.subr.bf16.mxu0 0
    %144 = vmatpush2.bf16.msra.mxu0 0
    %145 = vmatprep.subr.bf16.mxu0 0
    %146 = vmatpush2.bf16.msra.mxu0 0
    %147 = vmatprep.subr.bf16.mxu0 0
    %148 = vmatpush2.bf16.msra.mxu0 0
    %149 = vmatprep.mubr.bf16.mxu0 0
    %150 = vmatmul.mubr.bf16.gmra.mxu0 %v115
    %v151 = vpop.f32.mrf.mxu0
    %v152 = vadd.f32 0.0, %v151
    %v153 = vpop.f32.mrf.mxu0
    %v154 = vpop.f32.mrf.mxu0
    %v155 = vadd.f32 0.0, %v154
    %v156 = vpop.f32.mrf.mxu0
    %157 = vdwg.mxu0
    %v160 = vunpack.c.l.b16 %v56
    %v161 = vunpack.c.h.b16 %v56
    %v162 = vunpack.c.l.b16 %v57
    %v163 = vunpack.c.h.b16 %v57
    %v164 = vpack.c.b16 %v162, %v160
    %v165 = vpack.c.b16 %v163, %v161
    %v200 = vunpack.c.l.b16 %v58
    %v201 = vunpack.c.l.b16 %v59
    %v202 = vunpack.c.l.b16 %v60
    %v203 = vunpack.c.l.b16 %v61
    %v204 = vunpack.c.l.b16 %v62
    %v205 = vunpack.c.l.b16 %v63
    %v206 = vunpack.c.l.b16 %v64
    %v207 = vunpack.c.l.b16 %v65
    %v208 = vunpack.c.l.b16 %v66
    %v209 = vunpack.c.l.b16 %v67
    %v210 = vunpack.c.l.b16 %v68
    %v211 = vunpack.c.l.b16 %v69
    %v212 = vunpack.c.l.b16 %v70
    %v213 = vunpack.c.l.b16 %v71
    %v214 = vunpack.c.l.b16 %v72
    %v215 = vunpack.c.l.b16 %v73
    %v216 = vunpack.c.l.b16 %v74
    %v217 = vunpack.c.l.b16 %v75
    %v218 = vunpack.c.l.b16 %v76
    %v219 = vunpack.c.l.b16 %v77
    %v220 = vunpack.c.l.b16 %v78
    %v221 = vunpack.c.l.b16 %v79
    %v222 = vunpack.c.l.b16 %v80
    %v223 = vunpack.c.l.b16 %v81
    %v224 = vunpack.c.l.b16 %v82
    %v225 = vunpack.c.l.b16 %v83
    %v226 = vunpack.c.l.b16 %v84
    %v227 = vunpack.c.l.b16 %v85
    %v228 = vunpack.c.l.b16 %v86
    %v229 = vunpack.c.l.b16 %v87
    %v230 = vunpack.c.l.b16 %v88
    %v231 = vunpack.c.l.b16 %v89
    %v232 = vpack.c.b16 %v201, %v200
    %v233 = vpack.c.b16 %v203, %v202
    %v234 = vpack.c.b16 %v205, %v204
    %v235 = vpack.c.b16 %v207, %v206
    %v236 = vpack.c.b16 %v209, %v208
    %v237 = vpack.c.b16 %v211, %v210
    %v238 = vpack.c.b16 %v213, %v212
    %v239 = vpack.c.b16 %v215, %v214
    %v240 = vpack.c.b16 %v217, %v216
    %v241 = vpack.c.b16 %v219, %v218
    %v242 = vpack.c.b16 %v221, %v220
    %v243 = vpack.c.b16 %v223, %v222
    %v244 = vpack.c.b16 %v225, %v224
    %v245 = vpack.c.b16 %v227, %v226
    %v246 = vpack.c.b16 %v229, %v228
    %v247 = vpack.c.b16 %v231, %v230
    %264 = vmatprep.subr.bf16.mxu0 0
    %265 = vmatpush1.bf16.msra.mxu0 %v239
    %266 = vmatprep.subr.bf16.mxu0 0
    %267 = vmatpush1.bf16.msra.mxu0 %v238
    %268 = vmatprep.subr.bf16.mxu0 0
    %269 = vmatpush1.bf16.msra.mxu0 %v237
    %270 = vmatprep.subr.bf16.mxu0 0
    %271 = vmatpush1.bf16.msra.mxu0 %v236
    %272 = vmatprep.subr.bf16.mxu0 0
    %273 = vmatpush1.bf16.msra.mxu0 %v235
    %274 = vmatprep.subr.bf16.mxu0 0
    %275 = vmatpush1.bf16.msra.mxu0 %v234
    %276 = vmatprep.subr.bf16.mxu0 0
    %277 = vmatpush1.bf16.msra.mxu0 %v233
    %278 = vmatprep.subr.bf16.mxu0 0
    %279 = vmatpush1.bf16.msra.mxu0 %v232
    %280 = vmatprep.subr.bf16.mxu0 0
    %281 = vmatpush2.bf16.msra.mxu0 %v247
    %282 = vmatprep.subr.bf16.mxu0 0
    %283 = vmatpush2.bf16.msra.mxu0 %v246
    %284 = vmatprep.subr.bf16.mxu0 0
    %285 = vmatpush2.bf16.msra.mxu0 %v245
    %286 = vmatprep.subr.bf16.mxu0 0
    %287 = vmatpush2.bf16.msra.mxu0 %v244
    %288 = vmatprep.subr.bf16.mxu0 0
    %289 = vmatpush2.bf16.msra.mxu0 %v243
    %290 = vmatprep.subr.bf16.mxu0 0
    %291 = vmatpush2.bf16.msra.mxu0 %v242
    %292 = vmatprep.subr.bf16.mxu0 0
    %293 = vmatpush2.bf16.msra.mxu0 %v241
    %294 = vmatprep.subr.bf16.mxu0 0
    %295 = vmatpush2.bf16.msra.mxu0 %v240
    %296 = vmatprep.mubr.bf16.mxu0 %v165
    %297 = vmatmul.mubr.bf16.gmra.mxu0 %v164
    %v298 = vpop.f32.mrf.mxu0
    %v299 = vadd.f32 %v152, %v298
    %v300 = vpop.f32.mrf.mxu0
    %v301 = vpop.f32.mrf.mxu0
    %v302 = vadd.f32 %v155, %v301
    %v303 = vpop.f32.mrf.mxu0
    %304 = vdwg.mxu0
    %v305 = vlaneseq
    %v306 = vshrl.u32 %v305, 7
    %v307 = vsub.s32 0, %v306
    %v308 = vrot.slane %v55, %v307
    %v309 = vadd.f32 %v299, %v308
    %v310 = vadd.f32 %v302, %v308
    %v311 = vmax.f32 %v309, 0.0
    %v312 = vmax.f32 %v310, 0.0
    %v313 = vpack.c.bf16 %v312, %v311
    %v314 = vld [vmem:[#allocation2] sm:$0xf]
    %v315 = vld [vmem:[#allocation2 + $0x4] sm:$0xf]
    %v316 = vld [vmem:[#allocation2 + $0x8] sm:$0xf]
    %v317 = vld [vmem:[#allocation2 + $0xc] sm:$0xf]
    %v318 = vld [vmem:[#allocation2 + $0x10] sm:$0xf]
    %v319 = vld [vmem:[#allocation2 + $0x14] sm:$0xf]
    %v320 = vld [vmem:[#allocation2 + $0x18] sm:$0xf]
    %v321 = vld [vmem:[#allocation2 + $0x1c] sm:$0xf]
    %v322 = vld [vmem:[#allocation2 + $0x20] sm:$0xf]
    %v323 = vld [vmem:[#allocation2 + $0x24] sm:$0xf]
    %v324 = vld [vmem:[#allocation2 + $0x28] sm:$0xf]
    %v325 = vld [vmem:[#allocation2 + $0x2c] sm:$0xf]
    %v326 = vld [vmem:[#allocation2 + $0x30] sm:$0xf]
    %v327 = vld [vmem:[#allocation2 + $0x34] sm:$0xf]
    %v328 = vld [vmem:[#allocation2 + $0x38] sm:$0xf]
    %v329 = vld [vmem:[#allocation2 + $0x3c] sm:$0xf]
    %v330 = vlaneseq
    %v331 = vshrl.u32 %v330, 7
    %v332 = vsub.s32 1, %v331
    %v333 = vrot.slane %v55, %v332
    %v350 = vunpack.c.l.b16 %v314
    %v351 = vunpack.c.l.b16 %v315
    %v352 = vunpack.c.l.b16 %v316
    %v353 = vunpack.c.l.b16 %v317
    %v354 = vunpack.c.l.b16 %v318
    %v355 = vunpack.c.l.b16 %v319
    %v356 = vunpack.c.l.b16 %v320
    %v357 = vunpack.c.l.b16 %v321
    %v358 = vunpack.c.l.b16 %v322
    %v359 = vunpack.c.l.b16 %v323
    %v360 = vunpack.c.l.b16 %v324
    %v361 = vunpack.c.l.b16 %v325
    %v362 = vunpack.c.l.b16 %v326
    %v363 = vunpack.c.l.b16 %v327
    %v364 = vunpack.c.l.b16 %v328
    %v365 = vunpack.c.l.b16 %v329
    %v366 = vpack.c.b16 %v351, %v350
    %v367 = vpack.c.b16 %v353, %v352
    %v368 = vpack.c.b16 %v355, %v354
    %v369 = vpack.c.b16 %v357, %v356
    %v370 = vpack.c.b16 %v359, %v358
    %v371 = vpack.c.b16 %v361, %v360
    %v372 = vpack.c.b16 %v363, %v362
    %v373 = vpack.c.b16 %v365, %v364
    %382 = vmatprep.subr.bf16.mxu0 0
    %383 = vmatpush1.bf16.msra.mxu0 %v373
    %384 = vmatprep.subr.bf16.mxu0 0
    %385 = vmatpush1.bf16.msra.mxu0 %v372
    %386 = vmatprep.subr.bf16.mxu0 0
    %387 = vmatpush1.bf16.msra.mxu0 %v371
    %388 = vmatprep.subr.bf16.mxu0 0
    %389 = vmatpush1.bf16.msra.mxu0 %v370
    %390 = vmatprep.subr.bf16.mxu0 0
    %391 = vmatpush1.bf16.msra.mxu0 %v369
    %392 = vmatprep.subr.bf16.mxu0 0
    %393 = vmatpush1.bf16.msra.mxu0 %v368
    %394 = vmatprep.subr.bf16.mxu0 0
    %395 = vmatpush1.bf16.msra.mxu0 %v367
    %396 = vmatprep.subr.bf16.mxu0 0
    %397 = vmatpush1.bf16.msra.mxu0 %v366
    %398 = vmatprep.subr.bf16.mxu0 0
    %399 = vmatpush2.bf16.msra.mxu0 0
    %400 = vmatprep.subr.bf16.mxu0 0
    %401 = vmatpush2.bf16.msra.mxu0 0
    %402 = vmatprep.subr.bf16.mxu0 0
    %403 = vmatpush2.bf16.msra.mxu0 0
    %404 = vmatprep.subr.bf16.mxu0 0
    %405 = vmatpush2.bf16.msra.mxu0 0
    %406 = vmatprep.subr.bf16.mxu0 0
    %407 = vmatpush2.bf16.msra.mxu0 0
    %408 = vmatprep.subr.bf16.mxu0 0
    %409 = vmatpush2.bf16.msra.mxu0 0
    %410 = vmatprep.subr.bf16.mxu0 0
    %411 = vmatpush2.bf16.msra.mxu0 0
    %412 = vmatprep.subr.bf16.mxu0 0
    %413 = vmatpush2.bf16.msra.mxu0 0
    %414 = vmatprep.mubr.bf16.mxu0 0
    %415 = vmatmul.mubr.bf16.gmra.mxu0 %v313
    %v416 = vpop.f32.mrf.mxu0
    %v417 = vadd.f32 %v333, %v416
    %v418 = vpop.f32.mrf.mxu0
    %v419 = vpop.f32.mrf.mxu0
    %v420 = vadd.f32 %v333, %v419
    %v421 = vpop.f32.mrf.mxu0
    %422 = vdwg.mxu0
    %v423 = vmax.f32 %v417, 0.0
    %v424 = vmax.f32 %v420, 0.0
    %v425 = vpack.c.bf16 %v424, %v423
    %v426 = vld [vmem:[#allocation4] sm:$0xf]
    %v427 = vld [vmem:[#allocation4 + $0x4] sm:$0xf]
    %v428 = vld [vmem:[#allocation4 + $0x8] sm:$0xf]
    %v429 = vld [vmem:[#allocation4 + $0xc] sm:$0xf]
    %v430 = vld [vmem:[#allocation4 + $0x10] sm:$0xf]
    %v431 = vld [vmem:[#allocation4 + $0x14] sm:$0xf]
    %v432 = vld [vmem:[#allocation4 + $0x18] sm:$0xf]
    %v433 = vld [vmem:[#allocation4 + $0x1c] sm:$0xf]
    %v434 = vld [vmem:[#allocation4 + $0x20] sm:$0xf]
    %v435 = vld [vmem:[#allocation4 + $0x24] sm:$0xf]
    %v436 = vld [vmem:[#allocation4 + $0x28] sm:$0xf]
    %v437 = vld [vmem:[#allocation4 + $0x2c] sm:$0xf]
    %v438 = vld [vmem:[#allocation4 + $0x30] sm:$0xf]
    %v439 = vld [vmem:[#allocation4 + $0x34] sm:$0xf]
    %v440 = vld [vmem:[#allocation4 + $0x38] sm:$0xf]
    %v441 = vld [vmem:[#allocation4 + $0x3c] sm:$0xf]
    %v442 = vlaneseq
    %v443 = vshrl.u32 %v442, 7
    %v444 = vsub.s32 2, %v443
    %v445 = vrot.slane %v55, %v444
    %v462 = vunpack.c.l.b16 %v426
    %v463 = vunpack.c.l.b16 %v427
    %v464 = vunpack.c.l.b16 %v428
    %v465 = vunpack.c.l.b16 %v429
    %v466 = vunpack.c.l.b16 %v430
    %v467 = vunpack.c.l.b16 %v431
    %v468 = vunpack.c.l.b16 %v432
    %v469 = vunpack.c.l.b16 %v433
    %v470 = vunpack.c.l.b16 %v434
    %v471 = vunpack.c.l.b16 %v435
    %v472 = vunpack.c.l.b16 %v436
    %v473 = vunpack.c.l.b16 %v437
    %v474 = vunpack.c.l.b16 %v438
    %v475 = vunpack.c.l.b16 %v439
    %v476 = vunpack.c.l.b16 %v440
    %v477 = vunpack.c.l.b16 %v441
    %v478 = vpack.c.b16 %v463, %v462
    %v479 = vpack.c.b16 %v465, %v464
    %v480 = vpack.c.b16 %v467, %v466
    %v481 = vpack.c.b16 %v469, %v468
    %v482 = vpack.c.b16 %v471, %v470
    %v483 = vpack.c.b16 %v473, %v472
    %v484 = vpack.c.b16 %v475, %v474
    %v485 = vpack.c.b16 %v477, %v476
    %494 = vmatprep.subr.bf16.mxu0 0
    %495 = vmatpush1.bf16.msra.mxu0 %v485
    %496 = vmatprep.subr.bf16.mxu0 0
    %497 = vmatpush1.bf16.msra.mxu0 %v484
    %498 = vmatprep.subr.bf16.mxu0 0
    %499 = vmatpush1.bf16.msra.mxu0 %v483
    %500 = vmatprep.subr.bf16.mxu0 0
    %501 = vmatpush1.bf16.msra.mxu0 %v482
    %502 = vmatprep.subr.bf16.mxu0 0
    %503 = vmatpush1.bf16.msra.mxu0 %v481
    %504 = vmatprep.subr.bf16.mxu0 0
    %505 = vmatpush1.bf16.msra.mxu0 %v480
    %506 = vmatprep.subr.bf16.mxu0 0
    %507 = vmatpush1.bf16.msra.mxu0 %v479
    %508 = vmatprep.subr.bf16.mxu0 0
    %509 = vmatpush1.bf16.msra.mxu0 %v478
    %510 = vmatprep.subr.bf16.mxu0 0
    %511 = vmatpush2.bf16.msra.mxu0 0
    %512 = vmatprep.subr.bf16.mxu0 0
    %513 = vmatpush2.bf16.msra.mxu0 0
    %514 = vmatprep.subr.bf16.mxu0 0
    %515 = vmatpush2.bf16.msra.mxu0 0
    %516 = vmatprep.subr.bf16.mxu0 0
    %517 = vmatpush2.bf16.msra.mxu0 0
    %518 = vmatprep.subr.bf16.mxu0 0
    %519 = vmatpush2.bf16.msra.mxu0 0
    %520 = vmatprep.subr.bf16.mxu0 0
    %521 = vmatpush2.bf16.msra.mxu0 0
    %522 = vmatprep.subr.bf16.mxu0 0
    %523 = vmatpush2.bf16.msra.mxu0 0
    %524 = vmatprep.subr.bf16.mxu0 0
    %525 = vmatpush2.bf16.msra.mxu0 0
    %526 = vmatprep.mubr.bf16.mxu0 0
    %527 = vmatmul.mubr.bf16.gmra.mxu0 %v425
    %v528 = vpop.f32.mrf.mxu0
    %v529 = vadd.f32 %v445, %v528
    %v530 = vpop.f32.mrf.mxu0
    %v531 = vpop.f32.mrf.mxu0
    %v532 = vadd.f32 %v445, %v531
    %v533 = vpop.f32.mrf.mxu0
    %534 = vdwg.mxu0
    %v535 = vtanh.pop %v529
    %v536 = vtanh.pop %v532
    %v537 = vlaneseq
    %v538 = vshrl.u32 %v537, 7
    %v539 = vsub.s32 3, %v538
    %v540 = vrot.slane %v55, %v539
    %v541 = vmul.f32 %v535, %v540
    %v542 = vmul.f32 %v536, %v540
    %v543 = vlaneseq
    %v544 = vshrl.u32 %v543, 7
    %v545 = vsub.s32 4, %v544
    %v546 = vrot.slane %v55, %v545
    %v547 = vadd.f32 %v541, %v546
    %v548 = vadd.f32 %v542, %v546
    %v549 = vmul.f32 %v547, %v547
    %v550 = vmul.f32 %v548, %v548
    %v551 = vlaneseq
    %v552 = vshrl.u32 %v551, 7
    %v553 = vsub.s32 5, %v552
    %v554 = vrot.slane %v55, %v553
    %v555 = vmul.f32 %v549, %v554
    %v556 = vmul.f32 %v550, %v554
    %557 = vadd.xlane.f32.xlu0 %v555
    %v558 = vpop.xlane.xlu0 %557
    %559 = vadd.xlane.f32.xlu0 %v556
    %v560 = vpop.xlane.xlu0 %559
    %v561 = vadd.f32 %v558, 1e-12
    %v562 = vadd.f32 %v560, 1e-12
    %v563 = vrsqrt.pop %v561
    %v564 = vrsqrt.pop %v562
    %vm565 = vcmp.gt.f32.partialorder %v55, 0.5
    %v566 = vmul.f32 %v547, %v563
    %v567 = vmul.f32 %v548, %v564
    %v568 = vsel %vm565, 1, 0
    %v569 = vlaneseq
    %v570 = vshrl.u32 %v569, 7
    %v571 = vsub.s32 5, %v570
    %v572 = vrot.slane %v568, %v571
    %vm573 = vcmp.eq.s32.totalorder %v572, 1
    %v574 = vsel %vm573, %v566, %v547
    %v575 = vsel %vm573, %v567, %v548
    %576 = vst [vmem:[%s7] sm:$0xff] %v574
    %577 = vst [vmem:[%s7 + $0x8] sm:$0xff] %v575
    // Predicated region
    $region38: #{actor_forward.1} parent=1 // pred_check
      _
    $region39: #{actor_forward.1} parent=1 // pred_check_branch
      %579 = sbr.rel (0) target = $region41
    $region40: #{actor_forward.1} parent=1 // pred_region
      _
    $region41: #{actor_forward.1} parent=1 // pred_fallthru
      _
    // Predicated region
    $region42: #{actor_forward.1} parent=1 // pred_check
      _
    $region43: #{actor_forward.1} parent=1 // pred_check_branch
      %581 = sbr.rel (0) target = $region45
    $region44: #{actor_forward.1} parent=1 // pred_region
      _
    $region45: #{actor_forward.1} parent=1 // pred_fallthru
      _
    %582 = vsyncpa [#allocation3], 1
    %583 = vsyncpa [#allocation5], 1

</llo_original>
